<compile_context>
chip_gen: v7x
topology: tpu7x:2x2x1
jax: 0.10.0
libtpu: 0.0.40
codegen_flags: <defaults>
</compile_context>

<pallas_src>
import jax
import jax.numpy as jnp
from jax.experimental import pallas as pl
from jax.experimental.pallas import tpu as pltpu

_LANE = 128          # lane width (last-dim alignment for the class dim)
_SUBLANE_F32 = 8     # sublane multiple for f32 tiles
_SUBLANE_BF16 = 16   # sublane multiple for bf16 tiles (packed pairs)
_DEFAULT_TB = 1024   # batch-tile cap: amortizes per-step overhead, tiny VMEM


def _round_up(n, m):
    return ((n + m - 1) // m) * m


def _linear_kernel(x_ref, w_ref, b_ref, o_ref):
    # x_ref: (tb, F)  w_ref: (F, Cp)  b_ref: (1, Cp)  o_ref: (tb, Cp)
    acc = jnp.dot(x_ref[...], w_ref[...], preferred_element_type=jnp.float32)
    o_ref[...] = (acc + b_ref[...].astype(jnp.float32)).astype(o_ref.dtype)


def prepare_params(weight, bias, dtype=None):
    """One-time param prep: PyTorch (C, F) weight -> transposed (F, Cp).

    Only the class (lane) dim is zero-padded to 128; the contraction dim F
    stays at 100 — Mosaic pads the K edge internally for the MXU, so x never
    needs an HBM padding pass.  Padded class lanes (weight cols / bias) are
    zero, so the valid lanes of the output are exact.
    """
    C, F = weight.shape
    Cp = _round_up(C, _LANE)
    dtype = dtype or weight.dtype
    w_t = jnp.zeros((F, Cp), dtype).at[:, :C].set(weight.T.astype(dtype))
    b_p = jnp.zeros((1, Cp), jnp.float32).at[0, :C].set(bias.astype(jnp.float32))
    return w_t, b_p


def classifier_forward(x, w_t, b_p, *, num_classes=12, block_b=_DEFAULT_TB,
                       out_dtype=None, padded_output=False,
                       dropout=False, return_feat=False, reverse=False,
                       lambd=1.0):
    """Pallas implementation of Classifier.forward (fc3 only, as in the module).

    x:   (B, F) features (F = 100 for this module), f32 or bf16
    w_t: (F, Cp) pre-transposed, class-padded weight from prepare_params
    b_p: (1, Cp) class-padded f32 bias from prepare_params

    padded_output=True returns the lane-dense (B, 128) slab and skips the
    post-kernel slice (saves a full extra pass over the output).
    """
    # grad_reverse / dropout / reverse are identity in the forward pass.
    # TODO(synk): the -lambd gradient reversal lives in backward only; it would
    #             need a jax.custom_vjp wrapper, not a forward Pallas kernel.
    del dropout, reverse, lambd

    B, F = x.shape
    Fw, Cp = w_t.shape
    assert Fw == F, f"feature dim mismatch: x has {F}, weight has {Fw}"
    out_dtype = out_dtype or x.dtype

    sub = _SUBLANE_BF16 if x.dtype == jnp.bfloat16 else _SUBLANE_F32
    # Batch tile: as large as block_b to amortize per-step overhead, but capped
    # at ~ceil(B/2) so large batches always produce >= 2 grid steps (lets the
    # "parallel" axis shard across v7x's two TensorCores).
    tb = max(sub, min(block_b, _round_up(pl.cdiv(B, 2), sub)))
    grid = (pl.cdiv(B, tb),)   # partial last block; no batch padding pass

    out = pl.pallas_call(
        _linear_kernel,
        out_shape=jax.ShapeDtypeStruct((B, Cp), out_dtype),
        grid=grid,
        in_specs=[
            # x streams unpadded: last-dim block == full array dim (F=100) is
            # legal; Mosaic handles the ragged K edge internally.
            pl.BlockSpec((tb, F), lambda i: (i, 0)),
            # Weight / bias: constant index_map -> fetched once, resident
            # across all grid steps (no per-step DMA re-issue; ~64 KiB).
            pl.BlockSpec((F, Cp), lambda i: (0, 0)),
            pl.BlockSpec((1, Cp), lambda i: (0, 0)),
        ],
        # Lane-dense 128-wide output -> unmasked full vst per row.
        out_specs=pl.BlockSpec((tb, Cp), lambda i: (i, 0)),
        compiler_params=pltpu.CompilerParams(
            dimension_semantics=("parallel",)),
    )(x, w_t, b_p)

    y = out if padded_output else out[:, :num_classes]
    if return_feat:
        return y, x
    return y


def init_params(key, num_classes=12, in_features=100):
    """Deterministic synthetic init matching nn.Linear(100, num_classes) shapes."""
    kw, kb = jax.random.split(key)
    bound = 1.0 / jnp.sqrt(jnp.float32(in_features))
    weight = jax.random.uniform(kw, (num_classes, in_features), jnp.float32,
                                minval=-bound, maxval=bound)
    bias = jax.random.uniform(kb, (num_classes,), jnp.float32,
                              minval=-bound, maxval=bound)
    return weight, bias


if __name__ == "__main__":
    key = jax.random.PRNGKey(0)
    k_x, k_p, k_x2 = jax.random.split(key, 3)

    in_features = 100     # fc3 = nn.Linear(100, num_classes)
    num_classes = 12

    weight, bias = init_params(k_p, num_classes=num_classes,
                               in_features=in_features)
    # One-time parameter prep (transpose + class-lane padding only).
    w_t, b_p = prepare_params(weight, bias)

    # 1) Small aligned batch.
    x = jax.random.normal(k_x, (8, in_features), jnp.float32)
    y = jax.block_until_ready(
        classifier_forward(x, w_t, b_p, num_classes=num_classes))
    y_ref = x @ weight.T + bias
    assert y.shape == (8, num_classes)
    assert jnp.allclose(y, y_ref, atol=1e-4, rtol=1e-4)

    # 2) Ragged batch: exercises cdiv grid + partial last block (no pad pass).
    x2 = jax.random.normal(k_x2, (37, in_features), jnp.float32)
    y2 = jax.block_until_ready(
        classifier_forward(x2, w_t, b_p, num_classes=num_classes))
    assert y2.shape == (37, num_classes)
    assert jnp.allclose(y2, x2 @ weight.T + bias, atol=1e-4, rtol=1e-4)

    # 3) return_feat + slice-free padded output path.
    y3, feat = classifier_forward(x, w_t, b_p, num_classes=num_classes,
                                  return_feat=True, padded_output=True)
    jax.block_until_ready((y3, feat))
    assert y3.shape == (8, 128)
    assert jnp.allclose(y3[:, :num_classes], y_ref, atol=1e-4, rtol=1e-4)
    assert jnp.allclose(feat, x)

    print("KERNEL_OK")
</pallas_src>

<mosaic_0001>
module attributes {stable_mosaic.version = 11 : i64} {
  func.func @_linear_kernel(%arg0: i32, %arg1: memref<8x100xf32, #tpu.memory_space<vmem>>, %arg2: memref<100x128xf32, #tpu.memory_space<vmem>>, %arg3: memref<1x128xf32, #tpu.memory_space<vmem>>, %arg4: memref<8x128xf32, #tpu.memory_space<vmem>>) attributes {dimension_semantics = [#tpu.dimension_semantics<parallel>], iteration_bounds = array<i64: 1>, scalar_prefetch = 0 : i64, scratch_operands = 0 : i64, tpu.core_type = #tpu.core_type<tc>, window_params = [{transform_indices = @transform_0, window_bounds = array<i64: 8, 100>}, {pipeline_mode = #tpu.pipeline_mode<synchronous>, transform_indices = @transform_1, window_bounds = array<i64: 100, 128>}, {pipeline_mode = #tpu.pipeline_mode<synchronous>, transform_indices = @transform_2, window_bounds = array<i64: 1, 128>}, {transform_indices = @transform_3, window_bounds = array<i64: 8, 128>}]} {
    %c0 = arith.constant 0 : index
    %c0_0 = arith.constant 0 : index
    %0 = vector.load %arg1[%c0, %c0_0] : memref<8x100xf32, #tpu.memory_space<vmem>>, vector<8x100xf32>
    %c0_1 = arith.constant 0 : index
    %c0_2 = arith.constant 0 : index
    %1 = vector.load %arg2[%c0_1, %c0_2] : memref<100x128xf32, #tpu.memory_space<vmem>>, vector<100x128xf32>
    %cst = arith.constant dense<0.000000e+00> : vector<8x128xf32>
    %2 = tpu.matmul %0, %1, %cst {dimension_numbers = #tpu.dot_dimension_numbers<[1], [0], [0], [1], [0, 0, 1, 1], [], []>} : vector<8x100xf32>, vector<100x128xf32>, vector<8x128xf32> -> vector<8x128xf32>
    %c0_3 = arith.constant 0 : index
    %c0_4 = arith.constant 0 : index
    %3 = vector.load %arg3[%c0_3, %c0_4] : memref<1x128xf32, #tpu.memory_space<vmem>>, vector<1x128xf32>
    %4 = vector.broadcast %3 : vector<1x128xf32> to vector<8x128xf32>
    %5 = arith.addf %2, %4 : vector<8x128xf32>
    %c0_5 = arith.constant 0 : index
    %c0_6 = arith.constant 0 : index
    %6 = vector.load %arg4[%c0_5, %c0_6] : memref<8x128xf32, #tpu.memory_space<vmem>>, vector<8x128xf32>
    tpu.vector_store %arg4[%c0_5, %c0_6], %5 {strides = array<i32>} : memref<8x128xf32, #tpu.memory_space<vmem>>, vector<8x128xf32>,
    return
  }
  func.func @transform_0(%arg0: i32) -> (i32, i32) {
    %c0_i32 = arith.constant 0 : i32
    %c0_i32_0 = arith.constant 0 : i32
    return %arg0, %c0_i32 : i32, i32
  }
  func.func @transform_1(%arg0: i32) -> (i32, i32) {
    %c0_i32 = arith.constant 0 : i32
    %c0_i32_0 = arith.constant 0 : i32
    %c0_i32_1 = arith.constant 0 : i32
    return %c0_i32, %c0_i32_0 : i32, i32
  }
  func.func @transform_2(%arg0: i32) -> (i32, i32) {
    %c0_i32 = arith.constant 0 : i32
    %c0_i32_0 = arith.constant 0 : i32
    %c0_i32_1 = arith.constant 0 : i32
    return %c0_i32, %c0_i32_0 : i32, i32
  }
  func.func @transform_3(%arg0: i32) -> (i32, i32) {
    %c0_i32 = arith.constant 0 : i32
    %c0_i32_0 = arith.constant 0 : i32
    return %arg0, %c0_i32 : i32, i32
  }
}

</mosaic_0001>

<llo_original>
// kernel: tpu_custom_call.1
$region0: #{tpu_custom_call.1}
  #allocation0 [shape = 'u32[]', space=smem, size = 0x4, offset = 0x4, fixed_abs, tag = 'smem constant byte address 0x4 - core index']
  #allocation1 [shape = 'u32[144,128]{1,0:T(1,128)}', space=vmem, size = 0x12000, scoped, tag = 'internal scratch']
  %s0 = inlined_call_operand.hbm [shape: f32[8,100], index: 0, kind: input, shape index: {}]
  %s1 = inlined_call_operand.hbm [shape: f32[100,128], index: 1, kind: input, shape index: {}]
  %s2 = inlined_call_operand.vmem [shape: f32[1,128], index: 2, kind: input, shape index: {}]
  %s3 = inlined_call_operand.hbm [shape: f32[8,128], index: 3, kind: output, shape index: {}]
  %s4 = sld [smem:[#allocation0]]
  $region30: #{tpu_custom_call.1} parent=0
    _
  %s6 = ssub.s32 1, %s4
  %s7 = scalar_select 0, %s6, %s4
  $region1: #{tpu_custom_call.1} parent=0
    #allocation2 [shape = 'u8[4096]{0}', space=vmem, size = 0x1000, scoped, tag = 'input window, operand 0, single buffered']
    #allocation3 [shape = 's32[1]{0}', space=sflag, size = 0x4, scoped, tag = 'scoped memory for tpu_custom_call.1']
    #allocation4 [shape = 's32[1]{0}', space=sflag, size = 0x4, scoped, tag = 'scoped memory for tpu_custom_call.1']
    #allocation5 [shape = 'u8[53248]{0}', space=vmem, size = 0xd000, scoped, tag = 'input window, operand 1, single buffered']
    #allocation6 [shape = 's32[1]{0}', space=sflag, size = 0x4, scoped, tag = 'scoped memory for tpu_custom_call.1']
    #allocation7 [shape = 'u8[4096]{0}', space=vmem, size = 0x1000, scoped, tag = 'output window, operand 0, single buffered']
    %8 = vsyncpa [#allocation3], 0
    %9 = vsyncpa [#allocation6], 0
    %10 = vsyncpa [#allocation4], 0
    // Predicated region
    $region2: #{tpu_custom_call.1} parent=1 // pred_check
      _
    $region3: #{tpu_custom_call.1} parent=1 // pred_check_branch
      %12 = sbr.rel (0) target = $region5
    $region4: #{tpu_custom_call.1} parent=1 // pred_region
      %s14 = ssub.s32 128, 128
      %15 = vsyncadd [#allocation3], %s14
      %s17 = sshll.u32 [#allocation2], 4
      %s18 = int_to_ptr.vmem [resolvable:$true] %s17
      %20 = dma.hbm_to_vmem [thread:$0]  %s0, 128, %s18, [#allocation3]
    $region5: #{tpu_custom_call.1} parent=1 // pred_fallthru
      _
    // Predicated region
    $region6: #{tpu_custom_call.1} parent=1 // pred_check
      _
    $region7: #{tpu_custom_call.1} parent=1 // pred_check_branch
      %22 = sbr.rel (0) target = $region9
    $region8: #{tpu_custom_call.1} parent=1 // pred_region
      %s24 = ssub.s32 1664, 1664
      %25 = vsyncadd [#allocation6], %s24
      %s26 = sshll.u32 [#allocation5], 4
      %s27 = int_to_ptr.vmem [resolvable:$true] %s26
      %32 = dma.hbm_to_vmem [thread:$0]  %s1, 1664, %s27, [#allocation6], 128, 128, 8
    $region9: #{tpu_custom_call.1} parent=1 // pred_fallthru
      _
    // Predicated region
    $region10: #{tpu_custom_call.1} parent=1 // pred_check
      _
    $region11: #{tpu_custom_call.1} parent=1 // pred_check_branch
      %34 = sbr.rel (0) target = $region13
    $region12: #{tpu_custom_call.1} parent=1 // pred_region
      _
    $region13: #{tpu_custom_call.1} parent=1 // pred_fallthru
      _
    // Predicated region
    $region14: #{tpu_custom_call.1} parent=1 // pred_check
      _
    $region15: #{tpu_custom_call.1} parent=1 // pred_check_branch
      %36 = sbr.rel (0) target = $region17
    $region16: #{tpu_custom_call.1} parent=1 // pred_region
      %37 = dma.done [#allocation3], 128
    $region17: #{tpu_custom_call.1} parent=1 // pred_fallthru
      _
    // Predicated region
    $region18: #{tpu_custom_call.1} parent=1 // pred_check
      _
    $region19: #{tpu_custom_call.1} parent=1 // pred_check_branch
      %39 = sbr.rel (0) target = $region21
    $region20: #{tpu_custom_call.1} parent=1 // pred_region
      %40 = dma.done [#allocation6], 1664
    $region21: #{tpu_custom_call.1} parent=1 // pred_fallthru
      _
    %v41 = vld [vmem:[#allocation2] sm:$0xff]
    %v42 = vld [vmem:[#allocation5] sm:$0xff]
    %v43 = vld [vmem:[#allocation5 + $0x8] sm:$0xff]
    %v44 = vld [vmem:[#allocation5 + $0x10] sm:$0xff]
    %v45 = vld [vmem:[#allocation5 + $0x18] sm:$0xff]
    %v46 = vld [vmem:[#allocation5 + $0x20] sm:$0xff]
    %v47 = vld [vmem:[#allocation5 + $0x28] sm:$0xff]
    %v48 = vld [vmem:[#allocation5 + $0x30] sm:$0xff]
    %v49 = vld [vmem:[#allocation5 + $0x38] sm:$0xff]
    %v50 = vld [vmem:[#allocation5 + $0x40] sm:$0xff]
    %v51 = vld [vmem:[#allocation5 + $0x48] sm:$0xff]
    %v52 = vld [vmem:[#allocation5 + $0x50] sm:$0xff]
    %v53 = vld [vmem:[#allocation5 + $0x58] sm:$0xff]
    %v54 = vld [vmem:[#allocation5 + $0x60] sm:$0xf]
    %v55 = vld [vmem:[%s2] sm:$0x1]
    %v57 = vlaneseq
    %v58 = vshrl.u32 %v57, 7
    %v59 = vsub.s32 0, %v58
    %v60 = vrot.slane %v55, %v59
    %vm62 = vcmask 818176
    %v64 = vsel %vm62, %v41, 0
    %vm66 = vcmask 1043456
    %v68 = vsel %vm66, %v54, 0
    %70 = vmatprep.subr.mxu0 0.0
    %71 = vmatpush1.msra.mxu0 %v42
    %72 = vmatprep.subr.mxu0 0.0
    %73 = vmatpush1.msra.mxu0 %v43
    %74 = vmatprep.subr.mxu0 0.0
    %75 = vmatpush1.msra.mxu0 %v44
    %76 = vmatprep.subr.mxu0 0.0
    %77 = vmatpush1.msra.mxu0 %v45
    %78 = vmatprep.subr.mxu0 0.0
    %79 = vmatpush1.msra.mxu0 %v46
    %80 = vmatprep.subr.mxu0 0.0
    %81 = vmatpush1.msra.mxu0 %v47
    %82 = vmatprep.subr.mxu0 0.0
    %83 = vmatpush1.msra.mxu0 %v48
    %84 = vmatprep.subr.mxu0 0.0
    %85 = vmatpush1.msra.mxu0 %v49
    %86 = vmatprep.subr.mxu0 0.0
    %87 = vmatpush1.msra.mxu0 %v50
    %88 = vmatprep.subr.mxu0 0.0
    %89 = vmatpush1.msra.mxu0 %v51
    %90 = vmatprep.subr.mxu0 0.0
    %91 = vmatpush1.msra.mxu0 %v52
    %92 = vmatprep.subr.mxu0 0.0
    %93 = vmatpush1.msra.mxu0 %v53
    %94 = vmatprep.subr.mxu0 0.0
    %95 = vmatpush1.msra.mxu0 %v68
    %96 = vmatprep.subr.mxu0 0.0
    %97 = vmatpush1.msra.mxu0 0.0
    %98 = vmatprep.subr.mxu0 0.0
    %99 = vmatpush1.msra.mxu0 0.0
    %100 = vmatprep.subr.mxu0 0.0
    %101 = vmatpush1.msra.mxu0 0.0
    %102 = vmatprep.subr.mxu0 0.0
    %103 = vmatpush1.msra.mxu0 0.0
    %104 = vmatprep.subr.mxu0 0.0
    %105 = vmatpush1.msra.mxu0 0.0
    %106 = vmatprep.subr.mxu0 0.0
    %107 = vmatpush1.msra.mxu0 0.0
    %108 = vmatprep.subr.mxu0 0.0
    %109 = vmatpush1.msra.mxu0 0.0
    %110 = vmatprep.subr.mxu0 0.0
    %111 = vmatpush1.msra.mxu0 0.0
    %112 = vmatprep.subr.mxu0 0.0
    %113 = vmatpush1.msra.mxu0 0.0
    %114 = vmatprep.subr.mxu0 0.0
    %115 = vmatpush1.msra.mxu0 0.0
    %116 = vmatprep.subr.mxu0 0.0
    %117 = vmatpush1.msra.mxu0 0.0
    %118 = vmatprep.subr.mxu0 0.0
    %119 = vmatpush1.msra.mxu0 0.0
    %120 = vmatprep.subr.mxu0 0.0
    %121 = vmatpush1.msra.mxu0 0.0
    %122 = vmatprep.subr.mxu0 0.0
    %123 = vmatpush1.msra.mxu0 0.0
    %124 = vmatprep.subr.mxu0 0.0
    %125 = vmatpush1.msra.mxu0 0.0
    %126 = vmatprep.subr.mxu0 0.0
    %127 = vmatpush1.msra.mxu0 0.0
    %128 = vmatprep.subr.mxu0 0.0
    %129 = vmatpush1.msra.mxu0 0.0
    %130 = vmatprep.subr.mxu0 0.0
    %131 = vmatpush1.msra.mxu0 0.0
    %132 = vmatprep.subr.mxu0 0.0
    %133 = vmatpush1.msra.mxu0 0.0
    %134 = vmatprep.mubr.f32.mxu0 0.0
    %135 = vmatmul.mubr.f32.gmra.mrb[0].mxu0 %v64
    %v136 = vpop.f32.mrb[0].mxu0
    %v137 = vadd.f32 %v60, %v136
    %v138 = vpop.f32.mrb[0].mxu0
    %139 = vdwg.mxu0
    %140 = vst [vmem:[#allocation7] sm:$0xff] %v137
    // Predicated region
    $region22: #{tpu_custom_call.1} parent=1 // pred_check
      _
    $region23: #{tpu_custom_call.1} parent=1 // pred_check_branch
      %142 = sbr.rel (0) target = $region25
    $region24: #{tpu_custom_call.1} parent=1 // pred_region
      %s144 = ssub.s32 128, 128
      %145 = vsyncadd [#allocation4], %s144
      %s147 = sshll.u32 [#allocation7], 4
      %s148 = int_to_ptr.vmem [resolvable:$true] %s147
      %150 = dma.vmem_to_hbm [thread:$0]  %s148, 128, %s3, [#allocation4]
    $region25: #{tpu_custom_call.1} parent=1 // pred_fallthru
      _
    // Predicated region
    $region26: #{tpu_custom_call.1} parent=1 // pred_check
      _
    $region27: #{tpu_custom_call.1} parent=1 // pred_check_branch
      %152 = sbr.rel (0) target = $region29
    $region28: #{tpu_custom_call.1} parent=1 // pred_region
      %153 = dma.done [#allocation4], 128
    $region29: #{tpu_custom_call.1} parent=1 // pred_fallthru
      _
    %154 = vsyncpa [#allocation3], 1
    %155 = vsyncpa [#allocation6], 1
    %156 = vsyncpa [#allocation4], 1

</llo_original>
